<compile_context>
chip_gen: v7x
topology: tpu7x:2x2x1
jax: 0.10.0
libtpu: 0.0.40
codegen_flags: <defaults>
</compile_context>

<pallas_src>
import jax
import jax.numpy as jnp
from jax.experimental import pallas as pl
from jax.experimental.pallas import tpu as pltpu


def _swish_kernel(beta_ref, x_ref, o_ref):
    """o = x * sigmoid(beta * x) on one (tm, tn) VMEM tile."""
    beta = beta_ref[0]
    if o_ref.dtype == jnp.float32:
        x = x_ref[...]
        z = beta * x
        e = jnp.exp(-jnp.abs(z))                 # stable: exp of non-positive
        r = 1.0 / (1.0 + e)
        sig = jnp.where(z >= 0, r, e * r)
        o_ref[...] = x * sig
    else:
        # Reduced-precision inputs (bf16): compute in f32 but keep sigmoid on
        # the cheap EUP path (exp + approx reciprocal, no full-precision
        # Newton divide) so VPU/EUP never binds at v7x HBM bandwidth.
        # TODO(synk): int8 in/out would truncate swish to {-1,0,1}; only the
        # float paths are meaningful.
        x = x_ref[...].astype(jnp.float32)
        e = jnp.exp(-beta * x)
        sig = pl.reciprocal(1.0 + e, approx=True)
        o_ref[...] = (x * sig).astype(o_ref.dtype)


def _device_block_defaults():
    """(target_block_bytes, vmem_limit_bytes or None) per TPU generation."""
    kind = ""
    try:
        kind = jax.devices()[0].device_kind.lower()
    except Exception:
        pass
    if "v7" in kind or "7x" in kind:
        # 6 MiB blocks -> 24 MiB of double-buffered in+out; raise scoped VMEM.
        return 6 << 20, 48 << 20
    if "v6" in kind:
        # 4 MiB blocks -> 16 MiB of buffers, under the 32 MiB scoped default.
        return 4 << 20, None
    # v5e (16 MiB scoped VMEM default) and unknown chips: stay at 2 MiB.
    return 2 << 20, None


def swish(x, beta, *, target_block_bytes=None, vmem_limit_bytes=None):
    """Elementwise swish: x * sigmoid(beta * x). Any shape; f32/bf16."""
    orig_shape = x.shape
    dtype = x.dtype
    n = x.size
    itemsize = jnp.dtype(dtype).itemsize
    beta_f = jnp.asarray(beta, dtype=jnp.float32)

    if target_block_bytes is None or vmem_limit_bytes is None:
        tb, vl = _device_block_defaults()
        if target_block_bytes is None:
            target_block_bytes = tb
        if vmem_limit_bytes is None:
            vmem_limit_bytes = vl

    # ---- lane width: widest of {512, 256, 128} that divides numel ----------
    x_flat = jnp.ravel(x)
    for cand in (512, 256, 128):
        if n % cand == 0:
            tn = cand
            break
    else:
        tn = 128
    n_main = (n // tn) * tn          # 128-aligned prefix handled by the kernel
    n_tail = n - n_main              # < 128 elements handled in plain JAX

    if n_main == 0:
        # Tiny input: a kernel launch is pure overhead.
        xf = x_flat.astype(jnp.float32)
        out = (xf * jax.nn.sigmoid(beta_f * xf)).astype(dtype)
        return out.reshape(orig_shape)

    rows = n_main // tn
    x_main = x_flat if n_tail == 0 else jax.lax.slice(x_flat, (0,), (n_main,))
    x2d = x_main.reshape(rows, tn)

    # ---- block rows: dtype-aware sublane multiple, generation-sized blocks -
    sub = max(8, 32 // itemsize)                      # 8 f32 / 16 bf16 / 32 i8
    slab_bytes = rows * tn * itemsize
    if rows <= sub or slab_bytes <= min(target_block_bytes, 1 << 20):
        tm = rows                                     # single block, full dim
    else:
        max_rows = max(sub, target_block_bytes // (tn * itemsize))
        # Keep >=2 grid steps so ("parallel",) can use both v7x TensorCores.
        half_rows = -(-rows // 2)
        half_rows = -(-half_rows // sub) * sub
        tm = min(rows, max_rows, half_rows)
        tm = max(sub, (tm // sub) * sub)              # sublane alignment

    grid = (pl.cdiv(rows, tm),)   # ragged last block: OOB writes are dropped

    cp_kwargs = dict(dimension_semantics=("parallel",))
    if vmem_limit_bytes is not None:
        cp_kwargs["vmem_limit_bytes"] = vmem_limit_bytes

    out2d = pl.pallas_call(
        _swish_kernel,
        out_shape=jax.ShapeDtypeStruct((rows, tn), dtype),
        grid_spec=pl.GridSpec(
            grid=grid,
            in_specs=[
                pl.BlockSpec(memory_space=pltpu.MemorySpace.SMEM),   # beta
                pl.BlockSpec((tm, tn), lambda i: (i, 0)),            # x tile
            ],
            out_specs=pl.BlockSpec((tm, tn), lambda i: (i, 0)),
        ),
        compiler_params=pltpu.CompilerParams(**cp_kwargs),
        cost_estimate=pl.CostEstimate(
            flops=5 * n_main,
            transcendentals=n_main,
            bytes_accessed=2 * n_main * itemsize,
        ),
    )(beta_f.reshape(1), x2d)

    if n_tail == 0:
        return out2d.reshape(orig_shape)

    # TODO(synk): the concatenate is one extra pass over the prefix; a donated
    # dynamic_update_slice (or a 1-D-block kernel) could remove it entirely.
    tail = jax.lax.slice(x_flat, (n_main,), (n,)).astype(jnp.float32)
    out_tail = (tail * jax.nn.sigmoid(beta_f * tail)).astype(dtype)
    out_flat = jnp.concatenate([out2d.reshape(-1), out_tail])
    return out_flat.reshape(orig_shape)


def _ref_swish(x, beta):
    xf = x.astype(jnp.float32)
    return xf * jax.nn.sigmoid(jnp.float32(beta) * xf)


if __name__ == "__main__":
    key = jax.random.PRNGKey(0)
    k0, k1, k2, k3 = jax.random.split(key, 4)

    # Matches Swish.__init__: nn.Parameter(torch.tensor(1.0))
    beta = jnp.float32(1.0)

    # 1) Primary case: small NCHW activation, single lane-dense block.
    x = jax.random.normal(k0, (2, 4, 16, 16), dtype=jnp.float32)
    out = jax.block_until_ready(swish(x, beta))
    assert out.shape == x.shape and out.dtype == x.dtype
    assert jnp.max(jnp.abs(out - _ref_swish(x, beta))) < 1e-5

    # 2) Multi-block grid with a ragged last block (rows % tm != 0).
    x2 = jax.random.normal(k1, (8, 9, 16, 16), dtype=jnp.float32)
    out2 = jax.block_until_ready(swish(x2, 0.75, target_block_bytes=16 * 1024))
    assert jnp.max(jnp.abs(out2 - _ref_swish(x2, 0.75))) < 1e-5

    # 3) bf16 path (exp + approx reciprocal on the EUP).
    x3 = jax.random.normal(k2, (2, 4, 16, 16), dtype=jnp.bfloat16)
    out3 = jax.block_until_ready(swish(x3, beta))
    assert out3.dtype == jnp.bfloat16
    assert jnp.max(jnp.abs(out3.astype(jnp.float32) - _ref_swish(x3, beta))) < 5e-2

    # 4) numel not a multiple of 128: aligned prefix in-kernel + JAX tail.
    x4 = jax.random.normal(k3, (2, 3, 5, 7), dtype=jnp.float32)
    out4 = jax.block_until_ready(swish(x4, beta))
    assert jnp.max(jnp.abs(out4 - _ref_swish(x4, beta))) < 1e-5

    print("KERNEL_OK")
</pallas_src>

<mosaic_0001>
module attributes {stable_mosaic.version = 11 : i64} {
  func.func @_swish_kernel(%arg0: i32, %arg1: memref<1xf32, #tpu.memory_space<smem>>, %arg2: memref<4x512xf32, #tpu.memory_space<vmem>>, %arg3: memref<4x512xf32, #tpu.memory_space<vmem>>) attributes {dimension_semantics = [#tpu.dimension_semantics<parallel>], iteration_bounds = array<i64: 1>, scalar_prefetch = 0 : i64, scratch_operands = 0 : i64, tpu.core_type = #tpu.core_type<tc>, window_params = [{transform_indices = @transform_0, window_bounds = array<i64: 1>}, {transform_indices = @transform_1, window_bounds = array<i64: 4, 512>}, {transform_indices = @transform_2, window_bounds = array<i64: 4, 512>}]} {
    %c0 = arith.constant 0 : index
    %0 = memref.load %arg1[%c0] : memref<1xf32, #tpu.memory_space<smem>>
    %c0_0 = arith.constant 0 : index
    %c0_1 = arith.constant 0 : index
    %1 = vector.load %arg2[%c0_0, %c0_1] : memref<4x512xf32, #tpu.memory_space<vmem>>, vector<4x512xf32>
    %2 = vector.broadcast %0 : f32 to vector<4x512xf32>
    %3 = arith.mulf %2, %1 : vector<4x512xf32>
    %4 = math.absf %3 : vector<4x512xf32>
    %cst = arith.constant 0.000000e+00 : f32
    %5 = vector.broadcast %cst : f32 to vector<4x512xf32>
    %6 = arith.subf %5, %4 : vector<4x512xf32>
    %7 = math.exp %6 : vector<4x512xf32>
    %cst_2 = arith.constant 1.000000e+00 : f32
    %8 = vector.broadcast %cst_2 : f32 to vector<4x512xf32>
    %9 = arith.addf %8, %7 : vector<4x512xf32>
    %cst_3 = arith.constant 1.000000e+00 : f32
    %10 = vector.broadcast %cst_3 : f32 to vector<4x512xf32>
    %11 = arith.divf %10, %9 : vector<4x512xf32>
    %cst_4 = arith.constant 0.000000e+00 : f32
    %12 = vector.broadcast %cst_4 : f32 to vector<4x512xf32>
    %13 = arith.cmpf oge, %3, %12 : vector<4x512xf32>
    %14 = arith.mulf %7, %11 : vector<4x512xf32>
    %15 = arith.select %13, %11, %14 : vector<4x512xi1>, vector<4x512xf32>
    %16 = arith.mulf %1, %15 : vector<4x512xf32>
    %c0_5 = arith.constant 0 : index
    %c0_6 = arith.constant 0 : index
    %17 = vector.load %arg3[%c0_5, %c0_6] : memref<4x512xf32, #tpu.memory_space<vmem>>, vector<4x512xf32>
    tpu.vector_store %arg3[%c0_5, %c0_6], %16 {strides = array<i32>} : memref<4x512xf32, #tpu.memory_space<vmem>>, vector<4x512xf32>,
    return
  }
  func.func @transform_0(%arg0: i32) -> i32 {
    %c0_i32 = arith.constant 0 : i32
    %c0_i32_0 = arith.constant 0 : i32
    return %c0_i32 : i32
  }
  func.func @transform_1(%arg0: i32) -> (i32, i32) {
    %c0_i32 = arith.constant 0 : i32
    %c0_i32_0 = arith.constant 0 : i32
    return %arg0, %c0_i32 : i32, i32
  }
  func.func @transform_2(%arg0: i32) -> (i32, i32) {
    %c0_i32 = arith.constant 0 : i32
    %c0_i32_0 = arith.constant 0 : i32
    return %arg0, %c0_i32 : i32, i32
  }
}

</mosaic_0001>

<llo_original>
// kernel: tpu_custom_call.1
$region0: #{tpu_custom_call.1}
  #allocation0 [shape = 'u32[]', space=smem, size = 0x4, offset = 0x4, fixed_abs, tag = 'smem constant byte address 0x4 - core index']
  #allocation1 [shape = 'u32[144,128]{1,0:T(1,128)}', space=vmem, size = 0x12000, scoped, tag = 'internal scratch']
  #allocation2 [shape = 'f32[1]{0:T(128)S(6)}', space=smem, size = 0x200, scoped, tag = 'scoped memory for tpu_custom_call.1']
  %s0 = inlined_call_operand.<no memory space> [shape: f32[1], index: 0, kind: input, shape index: {}]
  %s1 = inlined_call_operand.hbm [shape: f32[4,512], index: 1, kind: input, shape index: {}]
  %s2 = inlined_call_operand.hbm [shape: f32[4,512], index: 2, kind: output, shape index: {}]
  %s3 = sld [smem:[#allocation0]]
  $region22: #{tpu_custom_call.1} parent=0
    _
  %s5 = ssub.s32 1, %s3
  %s6 = scalar_select 0, %s5, %s3
  %7 = sst [smem:[#allocation2]] %s0
  $region1: #{tpu_custom_call.1} parent=0
    #allocation3 [shape = 'u8[8192]{0}', space=vmem, size = 0x2000, scoped, tag = 'input window, operand 1, single buffered']
    #allocation4 [shape = 's32[1]{0}', space=sflag, size = 0x4, scoped, tag = 'scoped memory for tpu_custom_call.1']
    #allocation5 [shape = 's32[1]{0}', space=sflag, size = 0x4, scoped, tag = 'scoped memory for tpu_custom_call.1']
    #allocation6 [shape = 'u8[8192]{0}', space=vmem, size = 0x2000, scoped, tag = 'output window, operand 0, single buffered']
    %8 = vsyncpa [#allocation4], 0
    %9 = vsyncpa [#allocation5], 0
    // Predicated region
    $region2: #{tpu_custom_call.1} parent=1 // pred_check
      _
    $region3: #{tpu_custom_call.1} parent=1 // pred_check_branch
      %11 = sbr.rel (0) target = $region5
    $region4: #{tpu_custom_call.1} parent=1 // pred_region
      _
    $region5: #{tpu_custom_call.1} parent=1 // pred_fallthru
      _
    // Predicated region
    $region6: #{tpu_custom_call.1} parent=1 // pred_check
      _
    $region7: #{tpu_custom_call.1} parent=1 // pred_check_branch
      %13 = sbr.rel (0) target = $region9
    $region8: #{tpu_custom_call.1} parent=1 // pred_region
      %s15 = ssub.s32 256, 256
      %16 = vsyncadd [#allocation4], %s15
      %s18 = sshll.u32 [#allocation3], 4
      %s19 = int_to_ptr.vmem [resolvable:$true] %s18
      %21 = dma.hbm_to_vmem [thread:$0]  %s1, 256, %s19, [#allocation4]
    $region9: #{tpu_custom_call.1} parent=1 // pred_fallthru
      _
    // Predicated region
    $region10: #{tpu_custom_call.1} parent=1 // pred_check
      _
    $region11: #{tpu_custom_call.1} parent=1 // pred_check_branch
      %23 = sbr.rel (0) target = $region13
    $region12: #{tpu_custom_call.1} parent=1 // pred_region
      %24 = dma.done [#allocation4], 256
    $region13: #{tpu_custom_call.1} parent=1 // pred_fallthru
      _
    %s25 = sld [smem:[#allocation2]]
    %v26 = vld [vmem:[#allocation3] sm:$0xff]
    %v27 = vld [vmem:[#allocation3 + $0x8] sm:$0xff]
    %v28 = vstv %s25
    %v29 = vmul.f32 %v28, %v26
    %v30 = vmul.f32 %v28, %v27
    %v31 = vand.u32 2147483647, %v29
    %v32 = vand.u32 2147483647, %v30
    %v33 = vsub.f32 0.0, %v31
    %v34 = vsub.f32 0.0, %v32
    %v35 = vmul.f32 %v33, 1.442695
    %v36 = vpow.pop %v35
    %v37 = vmul.f32 %v34, 1.442695
    %v38 = vpow.pop %v37
    %v39 = vadd.f32 %v36, 1.0
    %v40 = vadd.f32 %v38, 1.0
    %v41 = vrcp.pop %v39
    %v42 = vmul.f32 1.0, %v41
    %v43 = vrcp.pop %v40
    %v44 = vmul.f32 1.0, %v43
    %vm45 = vcmp.ge.f32.partialorder %v29, 0.0
    %vm46 = vcmp.ge.f32.partialorder %v30, 0.0
    %v47 = vmul.f32 %v36, %v42
    %v48 = vmul.f32 %v38, %v44
    %v49 = vsel %vm45, %v42, %v47
    %v50 = vsel %vm46, %v44, %v48
    %v51 = vmul.f32 %v26, %v49
    %v52 = vmul.f32 %v27, %v50
    %53 = vst [vmem:[#allocation6] sm:$0xff] %v51
    %54 = vst [vmem:[#allocation6 + $0x8] sm:$0xff] %v52
    // Predicated region
    $region14: #{tpu_custom_call.1} parent=1 // pred_check
      _
    $region15: #{tpu_custom_call.1} parent=1 // pred_check_branch
      %56 = sbr.rel (0) target = $region17
    $region16: #{tpu_custom_call.1} parent=1 // pred_region
      %s58 = ssub.s32 256, 256
      %59 = vsyncadd [#allocation5], %s58
      %s61 = sshll.u32 [#allocation6], 4
      %s62 = int_to_ptr.vmem [resolvable:$true] %s61
      %64 = dma.vmem_to_hbm [thread:$0]  %s62, 256, %s2, [#allocation5]
    $region17: #{tpu_custom_call.1} parent=1 // pred_fallthru
      _
    // Predicated region
    $region18: #{tpu_custom_call.1} parent=1 // pred_check
      _
    $region19: #{tpu_custom_call.1} parent=1 // pred_check_branch
      %66 = sbr.rel (0) target = $region21
    $region20: #{tpu_custom_call.1} parent=1 // pred_region
      %67 = dma.done [#allocation5], 256
    $region21: #{tpu_custom_call.1} parent=1 // pred_fallthru
      _
    %68 = vsyncpa [#allocation4], 1
    %69 = vsyncpa [#allocation5], 1

</llo_original>
